<compile_context>
chip_gen: v6e
topology: v6e:2x2x1
jax: 0.10.0
libtpu: 0.0.40
codegen_flags: <defaults>
</compile_context>

<pallas_src>
import functools

import jax
import jax.numpy as jnp
from jax import lax
from jax.experimental import pallas as pl
from jax.experimental.pallas import tpu as pltpu

BN_EPS = 1e-5


def _conv_stats_kernel(p_ref, w_ref, conv_ref, stats_ref):
    """Pass 1: conv tile (im2col matmul) + per-channel sum / sum-of-squares.

    p_ref:     [K, TM]   im2col patches^T tile (columns beyond valid M are zero)
    w_ref:     [OC, K]   conv weight
    conv_ref:  [OC, TM]  lane-dense conv output tile (kept for pass 2)
    stats_ref: [OC, 2]   accumulated (sum, sumsq) per output channel
    """
    i = pl.program_id(0)
    conv = jnp.dot(w_ref[...], p_ref[...],
                   preferred_element_type=jnp.float32)        # [OC, TM]
    conv_ref[...] = conv

    @pl.when(i == 0)
    def _():
        stats_ref[...] = jnp.zeros_like(stats_ref)

    stats_ref[:, 0:1] += jnp.sum(conv, axis=1, keepdims=True)
    stats_ref[:, 1:2] += jnp.sum(conv * conv, axis=1, keepdims=True)


def _affine_relu_kernel(conv_ref, scale_ref, shift_ref, o_ref):
    """Pass 2: folded BN affine (precomputed scale/shift) + ReLU, pure VPU.

    conv_ref / o_ref: [OC, TM]  lane-dense tiles (o aliases conv's HBM buffer).
    """
    y = conv_ref[...] * scale_ref[...] + shift_ref[...]        # [OC,1] broadcast
    o_ref[...] = jnp.maximum(y, 0.0).astype(o_ref.dtype)


def _im2col_t(x, kh, kw, stride):
    """x: [N, C, H, W] -> patches^T [C*KH*KW, N*OH*OW], plus (OH, OW)."""
    n, c, h, w = x.shape
    oh = (h - kh) // stride + 1
    ow = (w - kw) // stride + 1
    taps = []
    for i in range(kh):
        for j in range(kw):
            taps.append(x[:, :, i:i + stride * oh:stride, j:j + stride * ow:stride])
    # [N, C, KH*KW, OH, OW] -> [C, KH*KW, N, OH, OW] -> [K, M]
    p = jnp.stack(taps, axis=2)
    p = p.transpose(1, 2, 0, 3, 4).reshape(c * kh * kw, n * oh * ow)
    return p, oh, ow


def _round_up(v, m):
    return ((v + m - 1) // m) * m


@functools.partial(jax.jit,
                   static_argnames=("kernel_size", "stride", "padding", "tile_m"))
def block_nd_forward(x, weight, gamma, beta, *,
                     kernel_size, stride, padding, tile_m=512):
    """BlockND.forward (2D case): pad(W) -> Conv2d -> BN(train) -> ReLU.

    x:      [N, C, H, W]      (NCHW, like PyTorch)
    weight: [OC, C, KH, KW]   (Conv2d weight, bias=False since norm='batch_norm')
    gamma, beta: [OC]         BatchNorm2d affine params
    padding: 2-tuple -> nnf.pad(x, padding) pads the LAST dim (W) only.
    Returns [N, OC, OH, OW].
    """
    kh = kw = kernel_size
    oc = weight.shape[0]

    # nnf.pad(x, (left, right)) with a 2-tuple pads only the last dimension (W).
    x = jnp.pad(x, ((0, 0), (0, 0), (0, 0), (padding[0], padding[1])))

    n, c, h, w = x.shape
    patches, oh, ow = _im2col_t(x, kh, kw, stride)            # [K, M]
    k, m = patches.shape

    # Lane-dense: M on the lane (last) axis, padded to a multiple of the M tile
    # (itself a multiple of 128).  Zero-padded columns contribute 0 to the stats.
    tm = _round_up(min(tile_m, _round_up(m, 128)), 128)
    m_pad = _round_up(m, tm)
    if m_pad != m:
        patches = jnp.pad(patches, ((0, 0), (0, m_pad - m)))

    # f32 matches PyTorch Conv2d numerics; switch to bf16 to halve the dominant
    # patch HBM->VMEM traffic at the cost of looser conv precision
    # (accumulation stays f32 either way).
    compute_dtype = jnp.float32
    patches = patches.astype(compute_dtype)
    w_mat = weight.reshape(oc, c * kh * kw).astype(compute_dtype)   # [OC, K]

    grid = (m_pad // tm,)

    # ---- pass 1: conv tiles (stored) + per-channel sum / sumsq --------------
    conv_flat, stats = pl.pallas_call(
        _conv_stats_kernel,
        out_shape=(jax.ShapeDtypeStruct((oc, m_pad), jnp.float32),
                   jax.ShapeDtypeStruct((oc, 2), jnp.float32)),
        grid_spec=pltpu.PrefetchScalarGridSpec(
            num_scalar_prefetch=0,
            grid=grid,
            in_specs=[
                pl.BlockSpec((k, tm), lambda i: (0, i)),
                pl.BlockSpec((oc, k), lambda i: (0, 0)),
            ],
            out_specs=[
                pl.BlockSpec((oc, tm), lambda i: (0, i)),
                pl.BlockSpec((oc, 2), lambda i: (0, 0)),
            ],
        ),
        compiler_params=pltpu.CompilerParams(
            dimension_semantics=("arbitrary",)),
    )(patches, w_mat)

    # ---- fold train-mode BN into one per-channel scale/shift (tiny vectors) -
    cnt = float(m)                                    # static: M = N*OH*OW
    mean = stats[:, 0] / cnt
    var = jnp.maximum(stats[:, 1] / cnt - mean * mean, 0.0)   # biased var (train)
    inv = lax.rsqrt(var + BN_EPS)
    g32 = gamma.astype(jnp.float32)
    scale = (g32 * inv).reshape(oc, 1)
    shift = (beta.astype(jnp.float32) - mean * g32 * inv).reshape(oc, 1)

    # ---- pass 2: affine + ReLU on stored conv, fully parallel over M tiles --
    out_flat = pl.pallas_call(
        _affine_relu_kernel,
        out_shape=jax.ShapeDtypeStruct((oc, m_pad), jnp.float32),
        grid_spec=pltpu.PrefetchScalarGridSpec(
            num_scalar_prefetch=0,
            grid=grid,
            in_specs=[
                pl.BlockSpec((oc, tm), lambda i: (0, i)),
                pl.BlockSpec((oc, 1), lambda i: (0, 0)),
                pl.BlockSpec((oc, 1), lambda i: (0, 0)),
            ],
            out_specs=pl.BlockSpec((oc, tm), lambda i: (0, i)),
        ),
        compiler_params=pltpu.CompilerParams(
            dimension_semantics=("parallel",)),
        input_output_aliases={0: 0},      # reuse conv buffer for the output
    )(conv_flat, scale, shift)

    # [OC, M] -> [OC, N, OH, OW] -> NCHW
    out = out_flat[:, :m].reshape(oc, n, oh, ow).transpose(1, 0, 2, 3)
    return out


def _reference_forward(x, weight, gamma, beta, *, kernel_size, stride, padding):
    """Pure-JAX reference (conv -> train-mode BN -> ReLU)."""
    x = jnp.pad(x, ((0, 0), (0, 0), (0, 0), (padding[0], padding[1])))
    conv = lax.conv_general_dilated(
        x.astype(jnp.float32), weight.astype(jnp.float32),
        window_strides=(stride, stride), padding="VALID",
        dimension_numbers=("NCHW", "OIHW", "NCHW"))
    mean = conv.mean(axis=(0, 2, 3), keepdims=True)
    var = ((conv - mean) ** 2).mean(axis=(0, 2, 3), keepdims=True)
    y = (conv - mean) * lax.rsqrt(var + BN_EPS)
    y = y * gamma.reshape(1, -1, 1, 1) + beta.reshape(1, -1, 1, 1)
    return jnp.maximum(y, 0.0)


if __name__ == "__main__":
    # BlockND(in_channels=4, out_channels=8, kernel_size=3, pool=1,
    #         padding=(1, 1), stride=1, norm='batch_norm', nonlin='relu')
    N, C, H, W = 2, 4, 16, 16
    OC, KS, STRIDE, PAD = 8, 3, 1, (1, 1)

    key = jax.random.PRNGKey(0)
    kx, kw_, kg, kb = jax.random.split(key, 4)
    x = jax.random.normal(kx, (N, C, H, W), dtype=jnp.float32)
    weight = jax.random.normal(kw_, (OC, C, KS, KS), dtype=jnp.float32) * 0.1
    gamma = 1.0 + 0.1 * jax.random.normal(kg, (OC,), dtype=jnp.float32)
    beta = 0.1 * jax.random.normal(kb, (OC,), dtype=jnp.float32)

    out = block_nd_forward(x, weight, gamma, beta,
                           kernel_size=KS, stride=STRIDE, padding=PAD,
                           tile_m=512)
    out = jax.block_until_ready(out)

    ref = _reference_forward(x, weight, gamma, beta,
                             kernel_size=KS, stride=STRIDE, padding=PAD)

    oh_exp = H - KS + 1                          # no padding on H
    ow_exp = (W + PAD[0] + PAD[1]) - KS + 1      # padding on W only
    assert out.shape == (N, OC, oh_exp, ow_exp), out.shape
    assert ref.shape == out.shape, (ref.shape, out.shape)
    max_err = float(jnp.max(jnp.abs(out - ref)))
    assert jnp.allclose(out, ref, atol=1e-4, rtol=1e-4), f"mismatch vs reference, max|err|={max_err}"

    print("KERNEL_OK")
</pallas_src>

<mosaic_0001>
module attributes {stable_mosaic.version = 11 : i64} {
  func.func @_conv_stats_kernel(%arg0: i32, %arg1: memref<36x512xf32, #tpu.memory_space<vmem>>, %arg2: memref<8x36xf32, #tpu.memory_space<vmem>>, %arg3: memref<8x512xf32, #tpu.memory_space<vmem>>, %arg4: memref<8x2xf32, #tpu.memory_space<vmem>>) attributes {dimension_semantics = [#tpu.dimension_semantics<arbitrary>], iteration_bounds = array<i64: 1>, scalar_prefetch = 0 : i64, scratch_operands = 0 : i64, tpu.core_type = #tpu.core_type<tc>, window_params = [{transform_indices = @transform_0, window_bounds = array<i64: 36, 512>}, {pipeline_mode = #tpu.pipeline_mode<synchronous>, transform_indices = @transform_1, window_bounds = array<i64: 8, 36>}, {transform_indices = @transform_2, window_bounds = array<i64: 8, 512>}, {pipeline_mode = #tpu.pipeline_mode<synchronous>, transform_indices = @transform_3, window_bounds = array<i64: 8, 2>}]} {
    %c0 = arith.constant 0 : index
    %c0_0 = arith.constant 0 : index
    %0 = vector.load %arg2[%c0, %c0_0] : memref<8x36xf32, #tpu.memory_space<vmem>>, vector<8x36xf32>
    %c0_1 = arith.constant 0 : index
    %c0_2 = arith.constant 0 : index
    %1 = vector.load %arg1[%c0_1, %c0_2] : memref<36x512xf32, #tpu.memory_space<vmem>>, vector<36x512xf32>
    %cst = arith.constant dense<0.000000e+00> : vector<8x512xf32>
    %2 = tpu.matmul %0, %1, %cst {dimension_numbers = #tpu.dot_dimension_numbers<[1], [0], [0], [1], [0, 0, 1, 1], [], []>} : vector<8x36xf32>, vector<36x512xf32>, vector<8x512xf32> -> vector<8x512xf32>
    %c0_3 = arith.constant 0 : index
    %c0_4 = arith.constant 0 : index
    %3 = vector.load %arg3[%c0_3, %c0_4] : memref<8x512xf32, #tpu.memory_space<vmem>>, vector<8x512xf32>
    tpu.vector_store %arg3[%c0_3, %c0_4], %2 {strides = array<i32>} : memref<8x512xf32, #tpu.memory_space<vmem>>, vector<8x512xf32>,
    %c0_i32 = arith.constant 0 : i32
    %4 = arith.cmpi eq, %arg0, %c0_i32 : i32
    %5 = arith.extui %4 : i1 to i32
    %c0_i32_5 = arith.constant 0 : i32
    %6 = arith.cmpi ne, %5, %c0_i32_5 : i32
    scf.if %6 {
      %cst_15 = arith.constant 0.000000e+00 : f32
      %18 = vector.broadcast %cst_15 : f32 to vector<8x2xf32>
      %c0_16 = arith.constant 0 : index
      %c0_17 = arith.constant 0 : index
      %19 = vector.load %arg4[%c0_16, %c0_17] : memref<8x2xf32, #tpu.memory_space<vmem>>, vector<8x2xf32>
      tpu.vector_store %arg4[%c0_16, %c0_17], %18 {strides = array<i32>} : memref<8x2xf32, #tpu.memory_space<vmem>>, vector<8x2xf32>,
    } else {
    }
    %c0_6 = arith.constant 0 : index
    %c0_7 = arith.constant 0 : index
    %7 = vector.load %arg4[%c0_6, %c0_7] : memref<8x2xf32, #tpu.memory_space<vmem>>, vector<8x1xf32>
    %cst_8 = arith.constant dense<0.000000e+00> : vector<8xf32>
    %8 = vector.multi_reduction <add>, %2, %cst_8 [1] : vector<8x512xf32> to vector<8xf32>
    %9 = vector.shape_cast %8 : vector<8xf32> to vector<8x1xf32>
    %10 = arith.addf %7, %9 : vector<8x1xf32>
    %c0_9 = arith.constant 0 : index
    %c0_10 = arith.constant 0 : index
    %11 = vector.load %arg4[%c0_9, %c0_10] : memref<8x2xf32, #tpu.memory_space<vmem>>, vector<8x1xf32>
    tpu.vector_store %arg4[%c0_9, %c0_10], %10 {strides = array<i32>} : memref<8x2xf32, #tpu.memory_space<vmem>>, vector<8x1xf32>,
    %c0_11 = arith.constant 0 : index
    %c1 = arith.constant 1 : index
    %12 = vector.load %arg4[%c0_11, %c1] : memref<8x2xf32, #tpu.memory_space<vmem>>, vector<8x1xf32>
    %13 = arith.mulf %2, %2 : vector<8x512xf32>
    %cst_12 = arith.constant dense<0.000000e+00> : vector<8xf32>
    %14 = vector.multi_reduction <add>, %13, %cst_12 [1] : vector<8x512xf32> to vector<8xf32>
    %15 = vector.shape_cast %14 : vector<8xf32> to vector<8x1xf32>
    %16 = arith.addf %12, %15 : vector<8x1xf32>
    %c0_13 = arith.constant 0 : index
    %c1_14 = arith.constant 1 : index
    %17 = vector.load %arg4[%c0_13, %c1_14] : memref<8x2xf32, #tpu.memory_space<vmem>>, vector<8x1xf32>
    tpu.vector_store %arg4[%c0_13, %c1_14], %16 {strides = array<i32>} : memref<8x2xf32, #tpu.memory_space<vmem>>, vector<8x1xf32>,
    return
  }
  func.func @transform_0(%arg0: i32) -> (i32, i32) {
    %c0_i32 = arith.constant 0 : i32
    %c0_i32_0 = arith.constant 0 : i32
    return %c0_i32, %arg0 : i32, i32
  }
  func.func @transform_1(%arg0: i32) -> (i32, i32) {
    %c0_i32 = arith.constant 0 : i32
    %c0_i32_0 = arith.constant 0 : i32
    %c0_i32_1 = arith.constant 0 : i32
    return %c0_i32, %c0_i32_0 : i32, i32
  }
  func.func @transform_2(%arg0: i32) -> (i32, i32) {
    %c0_i32 = arith.constant 0 : i32
    %c0_i32_0 = arith.constant 0 : i32
    return %c0_i32, %arg0 : i32, i32
  }
  func.func @transform_3(%arg0: i32) -> (i32, i32) {
    %c0_i32 = arith.constant 0 : i32
    %c0_i32_0 = arith.constant 0 : i32
    %c0_i32_1 = arith.constant 0 : i32
    return %c0_i32, %c0_i32_0 : i32, i32
  }
}

module attributes {stable_mosaic.version = 11 : i64} {
  func.func @_affine_relu_kernel(%arg0: i32, %arg1: memref<8x512xf32, #tpu.memory_space<vmem>>, %arg2: memref<8x1xf32, #tpu.memory_space<vmem>>, %arg3: memref<8x1xf32, #tpu.memory_space<vmem>>, %arg4: memref<8x512xf32, #tpu.memory_space<vmem>>) attributes {dimension_semantics = [#tpu.dimension_semantics<parallel>], iteration_bounds = array<i64: 1>, scalar_prefetch = 0 : i64, scratch_operands = 0 : i64, tpu.core_type = #tpu.core_type<tc>, window_params = [{transform_indices = @transform_0, window_bounds = array<i64: 8, 512>}, {pipeline_mode = #tpu.pipeline_mode<synchronous>, transform_indices = @transform_1, window_bounds = array<i64: 8, 1>}, {pipeline_mode = #tpu.pipeline_mode<synchronous>, transform_indices = @transform_2, window_bounds = array<i64: 8, 1>}, {transform_indices = @transform_3, window_bounds = array<i64: 8, 512>}]} {
    %c0 = arith.constant 0 : index
    %c0_0 = arith.constant 0 : index
    %0 = vector.load %arg1[%c0, %c0_0] : memref<8x512xf32, #tpu.memory_space<vmem>>, vector<8x512xf32>
    %c0_1 = arith.constant 0 : index
    %c0_2 = arith.constant 0 : index
    %1 = vector.load %arg2[%c0_1, %c0_2] : memref<8x1xf32, #tpu.memory_space<vmem>>, vector<8x1xf32>
    %2 = vector.broadcast %1 : vector<8x1xf32> to vector<8x512xf32>
    %3 = arith.mulf %0, %2 : vector<8x512xf32>
    %c0_3 = arith.constant 0 : index
    %c0_4 = arith.constant 0 : index
    %4 = vector.load %arg3[%c0_3, %c0_4] : memref<8x1xf32, #tpu.memory_space<vmem>>, vector<8x1xf32>
    %5 = vector.broadcast %4 : vector<8x1xf32> to vector<8x512xf32>
    %6 = arith.addf %3, %5 : vector<8x512xf32>
    %cst = arith.constant 0.000000e+00 : f32
    %7 = vector.broadcast %cst : f32 to vector<8x512xf32>
    %8 = arith.maximumf %6, %7 : vector<8x512xf32>
    %c0_5 = arith.constant 0 : index
    %c0_6 = arith.constant 0 : index
    %9 = vector.load %arg4[%c0_5, %c0_6] : memref<8x512xf32, #tpu.memory_space<vmem>>, vector<8x512xf32>
    tpu.vector_store %arg4[%c0_5, %c0_6], %8 {strides = array<i32>} : memref<8x512xf32, #tpu.memory_space<vmem>>, vector<8x512xf32>,
    return
  }
  func.func @transform_0(%arg0: i32) -> (i32, i32) {
    %c0_i32 = arith.constant 0 : i32
    %c0_i32_0 = arith.constant 0 : i32
    return %c0_i32, %arg0 : i32, i32
  }
  func.func @transform_1(%arg0: i32) -> (i32, i32) {
    %c0_i32 = arith.constant 0 : i32
    %c0_i32_0 = arith.constant 0 : i32
    %c0_i32_1 = arith.constant 0 : i32
    return %c0_i32, %c0_i32_0 : i32, i32
  }
  func.func @transform_2(%arg0: i32) -> (i32, i32) {
    %c0_i32 = arith.constant 0 : i32
    %c0_i32_0 = arith.constant 0 : i32
    %c0_i32_1 = arith.constant 0 : i32
    return %c0_i32, %c0_i32_0 : i32, i32
  }
  func.func @transform_3(%arg0: i32) -> (i32, i32) {
    %c0_i32 = arith.constant 0 : i32
    %c0_i32_0 = arith.constant 0 : i32
    return %c0_i32, %arg0 : i32, i32
  }
}

</mosaic_0001>

<llo_original>
// kernel: block_nd_forward.3
$region0: #{block_nd_forward.3}
  #allocation0 [shape = 'u32[]', space=smem, size = 0x4, offset = 0x4, fixed_abs, tag = 'smem constant byte address 0x4 - core index']
  #allocation1 [shape = 'u32[144,128]{1,0:T(1,128)}', space=vmem, size = 0x12000, scoped, tag = 'internal scratch']
  %s0 = inlined_call_operand.vmem [shape: f32[8,512], index: 0, kind: input, shape index: {}, may-alias: {0,3}]
  %s1 = inlined_call_operand.vmem [shape: f32[8,1], index: 1, kind: input, shape index: {}]
  %s2 = inlined_call_operand.vmem [shape: f32[8,1], index: 2, kind: input, shape index: {}]
  %s3 = inlined_call_operand.vmem [shape: f32[8,512], index: 3, kind: output, shape index: {}, may-alias: {0,3}]
  %s4 = sld [smem:[#allocation0]]
  $region22: #{block_nd_forward.3} parent=0
    _
  %s6 = ssub.s32 1, %s4
  %s7 = scalar_select 0, %s6, %s4
  // Predicated region
  $region2: #{block_nd_forward.3} parent=0 // pred_check
    _
  $region3: #{block_nd_forward.3} parent=0 // pred_check_branch
    %9 = sbr.rel (0) target = $region5
  $region4: #{block_nd_forward.3} parent=0 // pred_region
    _
  $region5: #{block_nd_forward.3} parent=0 // pred_fallthru
    _
  // Predicated region
  $region6: #{block_nd_forward.3} parent=0 // pred_check
    _
  $region7: #{block_nd_forward.3} parent=0 // pred_check_branch
    %11 = sbr.rel (0) target = $region9
  $region8: #{block_nd_forward.3} parent=0 // pred_region
    _
  $region9: #{block_nd_forward.3} parent=0 // pred_fallthru
    _
  // Predicated region
  $region10: #{block_nd_forward.3} parent=0 // pred_check
    _
  $region11: #{block_nd_forward.3} parent=0 // pred_check_branch
    %13 = sbr.rel (0) target = $region13
  $region12: #{block_nd_forward.3} parent=0 // pred_region
    _
  $region13: #{block_nd_forward.3} parent=0 // pred_fallthru
    _
  %v14 = vld [vmem:[%s0] sm:$0xff]
  %v15 = vld [vmem:[%s0 + $0x8] sm:$0xff]
  %v16 = vld [vmem:[%s0 + $0x10] sm:$0xff]
  %v17 = vld [vmem:[%s0 + $0x18] sm:$0xff]
  %v18 = vld [vmem:[%s1] sm:$0xff]
  %20 = vset.pattern.permute.xlu0 0
  %21 = vperm.xlu0 %20, %v18
  %v22 = vpop.permute.xlu0 %21
  %v24 = vmul.f32 %v14, %v22
  %v25 = vmul.f32 %v15, %v22
  %v26 = vmul.f32 %v16, %v22
  %v27 = vmul.f32 %v17, %v22
  %v28 = vld [vmem:[%s2] sm:$0xff]
  %30 = vset.pattern.permute.xlu0 0
  %31 = vperm.xlu0 %30, %v28
  %v32 = vpop.permute.xlu0 %31
  %v34 = vadd.f32 %v24, %v32
  %v35 = vadd.f32 %v25, %v32
  %v36 = vadd.f32 %v26, %v32
  %v37 = vadd.f32 %v27, %v32
  %v38 = vmax.f32 %v34, 0.0
  %v39 = vmax.f32 %v35, 0.0
  %v40 = vmax.f32 %v36, 0.0
  %v41 = vmax.f32 %v37, 0.0
  %42 = vst [vmem:[%s3] sm:$0xff] %v38
  %43 = vst [vmem:[%s3 + $0x8] sm:$0xff] %v39
  %44 = vst [vmem:[%s3 + $0x10] sm:$0xff] %v40
  %45 = vst [vmem:[%s3 + $0x18] sm:$0xff] %v41
  // Predicated region
  $region14: #{block_nd_forward.3} parent=0 // pred_check
    _
  $region15: #{block_nd_forward.3} parent=0 // pred_check_branch
    %47 = sbr.rel (0) target = $region17
  $region16: #{block_nd_forward.3} parent=0 // pred_region
    _
  $region17: #{block_nd_forward.3} parent=0 // pred_fallthru
    _
  // Predicated region
  $region18: #{block_nd_forward.3} parent=0 // pred_check
    _
  $region19: #{block_nd_forward.3} parent=0 // pred_check_branch
    %49 = sbr.rel (0) target = $region21
  $region20: #{block_nd_forward.3} parent=0 // pred_region
    _
  $region21: #{block_nd_forward.3} parent=0 // pred_fallthru
    _

// kernel: block_nd_forward.2
$region0: #{block_nd_forward.2}
  #allocation0 [shape = 'u32[]', space=smem, size = 0x4, offset = 0x4, fixed_abs, tag = 'smem constant byte address 0x4 - core index']
  #allocation1 [shape = 'u32[144,128]{1,0:T(1,128)}', space=vmem, size = 0x12000, scoped, tag = 'internal scratch']
  %s0 = inlined_call_operand.vmem [shape: f32[36,512], index: 0, kind: input, shape index: {}]
  %s1 = inlined_call_operand.vmem [shape: f32[8,36], index: 1, kind: input, shape index: {}]
  %s2 = inlined_call_operand.vmem [shape: f32[8,512], index: 2, kind: output, shape index: {0}]
  %s3 = inlined_call_operand.vmem [shape: f32[8,2], index: 3, kind: output, shape index: {1}]
  %4 = xla_tuple %s2, %s3
  %s5 = sld [smem:[#allocation0]]
  $region30: #{block_nd_forward.2} parent=0
    _
  %s7 = ssub.s32 1, %s5
  %s8 = scalar_select 0, %s7, %s5
  // Predicated region
  $region2: #{block_nd_forward.2} parent=0 // pred_check
    _
  $region3: #{block_nd_forward.2} parent=0 // pred_check_branch
    %10 = sbr.rel (0) target = $region5
  $region4: #{block_nd_forward.2} parent=0 // pred_region
    _
  $region5: #{block_nd_forward.2} parent=0 // pred_fallthru
    _
  // Predicated region
  $region6: #{block_nd_forward.2} parent=0 // pred_check
    _
  $region7: #{block_nd_forward.2} parent=0 // pred_check_branch
    %12 = sbr.rel (0) target = $region9
  $region8: #{block_nd_forward.2} parent=0 // pred_region
    _
  $region9: #{block_nd_forward.2} parent=0 // pred_fallthru
    _
  %v13 = vld [vmem:[%s1] sm:$0xff]
  %v14 = vld [vmem:[%s0] sm:$0xff]
  %v15 = vld [vmem:[%s0 + $0x8] sm:$0xff]
  %v16 = vld [vmem:[%s0 + $0x10] sm:$0xff]
  %v17 = vld [vmem:[%s0 + $0x18] sm:$0xff]
  %v18 = vld [vmem:[%s0 + $0x20] sm:$0xff]
  %v19 = vld [vmem:[%s0 + $0x28] sm:$0xff]
  %v20 = vld [vmem:[%s0 + $0x30] sm:$0xff]
  %v21 = vld [vmem:[%s0 + $0x38] sm:$0xff]
  %v22 = vld [vmem:[%s0 + $0x40] sm:$0xff]
  %v23 = vld [vmem:[%s0 + $0x48] sm:$0xff]
  %v24 = vld [vmem:[%s0 + $0x50] sm:$0xff]
  %v25 = vld [vmem:[%s0 + $0x58] sm:$0xff]
  %v26 = vld [vmem:[%s0 + $0x60] sm:$0xff]
  %v27 = vld [vmem:[%s0 + $0x68] sm:$0xff]
  %v28 = vld [vmem:[%s0 + $0x70] sm:$0xff]
  %v29 = vld [vmem:[%s0 + $0x78] sm:$0xff]
  %v30 = vld [vmem:[%s0 + $0x80] sm:$0xf]
  %v31 = vld [vmem:[%s0 + $0x88] sm:$0xf]
  %v32 = vld [vmem:[%s0 + $0x90] sm:$0xf]
  %v33 = vld [vmem:[%s0 + $0x98] sm:$0xf]
  %vm34 = vcmask 293888
  %v36 = vsel %vm34, %v13, 0
  %vm38 = vcmask 1043456
  %v40 = vsel %vm38, %v30, 0
  %v43 = vsel %vm38, %v31, 0
  %v46 = vsel %vm38, %v32, 0
  %v49 = vsel %vm38, %v33, 0
  %51 = vmatprep.subr.mxu0 0.0
  %52 = vmatpush1.msra.mxu0 0.0
  %53 = vmatprep.subr.mxu0 0.0
  %54 = vmatpush1.msra.mxu0 0.0
  %55 = vmatprep.subr.mxu0 0.0
  %56 = vmatpush1.msra.mxu0 0.0
  %57 = vmatprep.subr.mxu0 0.0
  %58 = vmatpush1.msra.mxu0 0.0
  %59 = vmatprep.subr.mxu0 0.0
  %60 = vmatpush1.msra.mxu0 0.0
  %61 = vmatprep.subr.mxu0 0.0
  %62 = vmatpush1.msra.mxu0 0.0
  %63 = vmatprep.subr.mxu0 0.0
  %64 = vmatpush1.msra.mxu0 0.0
  %65 = vmatprep.subr.mxu0 0.0
  %66 = vmatpush1.msra.mxu0 0.0
  %67 = vmatprep.subr.mxu0 0.0
  %68 = vmatpush1.msra.mxu0 0.0
  %69 = vmatprep.subr.mxu0 0.0
  %70 = vmatpush1.msra.mxu0 0.0
  %71 = vmatprep.subr.mxu0 0.0
  %72 = vmatpush1.msra.mxu0 0.0
  %73 = vmatprep.subr.mxu0 %v43
  %74 = vmatpush1.msra.mxu0 %v40
  %75 = vmatprep.subr.mxu0 %v27
  %76 = vmatpush1.msra.mxu0 %v26
  %77 = vmatprep.subr.mxu0 %v23
  %78 = vmatpush1.msra.mxu0 %v22
  %79 = vmatprep.subr.mxu0 %v19
  %80 = vmatpush1.msra.mxu0 %v18
  %81 = vmatprep.subr.mxu0 %v15
  %82 = vmatpush1.msra.mxu0 %v14
  %83 = vmatprep.subr.mxu0 0.0
  %84 = vmatpush2.msra.mxu0 0.0
  %85 = vmatprep.subr.mxu0 0.0
  %86 = vmatpush2.msra.mxu0 0.0
  %87 = vmatprep.subr.mxu0 0.0
  %88 = vmatpush2.msra.mxu0 0.0
  %89 = vmatprep.subr.mxu0 0.0
  %90 = vmatpush2.msra.mxu0 0.0
  %91 = vmatprep.subr.mxu0 0.0
  %92 = vmatpush2.msra.mxu0 0.0
  %93 = vmatprep.subr.mxu0 0.0
  %94 = vmatpush2.msra.mxu0 0.0
  %95 = vmatprep.subr.mxu0 0.0
  %96 = vmatpush2.msra.mxu0 0.0
  %97 = vmatprep.subr.mxu0 0.0
  %98 = vmatpush2.msra.mxu0 0.0
  %99 = vmatprep.subr.mxu0 0.0
  %100 = vmatpush2.msra.mxu0 0.0
  %101 = vmatprep.subr.mxu0 0.0
  %102 = vmatpush2.msra.mxu0 0.0
  %103 = vmatprep.subr.mxu0 0.0
  %104 = vmatpush2.msra.mxu0 0.0
  %105 = vmatprep.subr.mxu0 0.0
  %106 = vmatpush2.msra.mxu0 0.0
  %107 = vmatprep.subr.mxu0 0.0
  %108 = vmatpush2.msra.mxu0 0.0
  %109 = vmatprep.subr.mxu0 0.0
  %110 = vmatpush2.msra.mxu0 0.0
  %111 = vmatprep.subr.mxu0 0.0
  %112 = vmatpush2.msra.mxu0 0.0
  %113 = vmatprep.subr.mxu0 0.0
  %114 = vmatpush2.msra.mxu0 0.0
  %115 = vmatprep.mubr.f32.mxu0 0.0
  %116 = vmatmul.mubr.f32.gmra.mxu0 %v36
  %v117 = vpop.f32.mrf.mxu0
  %v118 = vadd.f32 0.0, %v117
  %v119 = vpop.f32.mrf.mxu0
  %v120 = vadd.f32 0.0, %v119
  %121 = vdwg.mxu0
  %122 = vmatprep.subr.mxu0 0.0
  %123 = vmatpush1.msra.mxu0 0.0
  %124 = vmatprep.subr.mxu0 0.0
  %125 = vmatpush1.msra.mxu0 0.0
  %126 = vmatprep.subr.mxu0 0.0
  %127 = vmatpush1.msra.mxu0 0.0
  %128 = vmatprep.subr.mxu0 0.0
  %129 = vmatpush1.msra.mxu0 0.0
  %130 = vmatprep.subr.mxu0 0.0
  %131 = vmatpush1.msra.mxu0 0.0
  %132 = vmatprep.subr.mxu0 0.0
  %133 = vmatpush1.msra.mxu0 0.0
  %134 = vmatprep.subr.mxu0 0.0
  %135 = vmatpush1.msra.mxu0 0.0
  %136 = vmatprep.subr.mxu0 0.0
  %137 = vmatpush1.msra.mxu0 0.0
  %138 = vmatprep.subr.mxu0 0.0
  %139 = vmatpush1.msra.mxu0 0.0
  %140 = vmatprep.subr.mxu0 0.0
  %141 = vmatpush1.msra.mxu0 0.0
  %142 = vmatprep.subr.mxu0 0.0
  %143 = vmatpush1.msra.mxu0 0.0
  %144 = vmatprep.subr.mxu0 %v49
  %145 = vmatpush1.msra.mxu0 %v46
  %146 = vmatprep.subr.mxu0 %v29
  %147 = vmatpush1.msra.mxu0 %v28
  %148 = vmatprep.subr.mxu0 %v25
  %149 = vmatpush1.msra.mxu0 %v24
  %150 = vmatprep.subr.mxu0 %v21
  %151 = vmatpush1.msra.mxu0 %v20
  %152 = vmatprep.subr.mxu0 %v17
  %153 = vmatpush1.msra.mxu0 %v16
  %154 = vmatprep.subr.mxu0 0.0
  %155 = vmatpush2.msra.mxu0 0.0
  %156 = vmatprep.subr.mxu0 0.0
  %157 = vmatpush2.msra.mxu0 0.0
  %158 = vmatprep.subr.mxu0 0.0
  %159 = vmatpush2.msra.mxu0 0.0
  %160 = vmatprep.subr.mxu0 0.0
  %161 = vmatpush2.msra.mxu0 0.0
  %162 = vmatprep.subr.mxu0 0.0
  %163 = vmatpush2.msra.mxu0 0.0
  %164 = vmatprep.subr.mxu0 0.0
  %165 = vmatpush2.msra.mxu0 0.0
  %166 = vmatprep.subr.mxu0 0.0
  %167 = vmatpush2.msra.mxu0 0.0
  %168 = vmatprep.subr.mxu0 0.0
  %169 = vmatpush2.msra.mxu0 0.0
  %170 = vmatprep.subr.mxu0 0.0
  %171 = vmatpush2.msra.mxu0 0.0
  %172 = vmatprep.subr.mxu0 0.0
  %173 = vmatpush2.msra.mxu0 0.0
  %174 = vmatprep.subr.mxu0 0.0
  %175 = vmatpush2.msra.mxu0 0.0
  %176 = vmatprep.subr.mxu0 0.0
  %177 = vmatpush2.msra.mxu0 0.0
  %178 = vmatprep.subr.mxu0 0.0
  %179 = vmatpush2.msra.mxu0 0.0
  %180 = vmatprep.subr.mxu0 0.0
  %181 = vmatpush2.msra.mxu0 0.0
  %182 = vmatprep.subr.mxu0 0.0
  %183 = vmatpush2.msra.mxu0 0.0
  %184 = vmatprep.subr.mxu0 0.0
  %185 = vmatpush2.msra.mxu0 0.0
  %186 = vmatprep.mubr.f32.mxu0 0.0
  %187 = vmatmul.mubr.f32.gmra.mxu0 %v36
  %v188 = vpop.f32.mrf.mxu0
  %v189 = vadd.f32 0.0, %v188
  %v190 = vpop.f32.mrf.mxu0
  %v191 = vadd.f32 0.0, %v190
  %192 = vdwg.mxu0
  %193 = vst [vmem:[%s2] sm:$0xff] %v118
  %194 = vst [vmem:[%s2 + $0x8] sm:$0xff] %v120
  %195 = vst [vmem:[%s2 + $0x10] sm:$0xff] %v189
  %196 = vst [vmem:[%s2 + $0x18] sm:$0xff] %v191
  %p197 = scmp.eq.s32.totalorder 0, 0
  // Predicated region
  $region10: #{block_nd_forward.2} parent=0 // pred_check
    %p198 = pneg %p197
  $region11: #{block_nd_forward.2} parent=0 // pred_check_branch
    %200 = sbr.rel (%p198) target = $region13
  $region12: #{block_nd_forward.2} parent=0 // pred_region
    %vm201 = vcmask 15360
    %202 = vst.msk [vmem:[%s3] sm:$0xff] %vm201, 0.0
  $region13: #{block_nd_forward.2} parent=0 // pred_fallthru
    _
  %v203 = vld [vmem:[%s3] sm:$0xff]
  %v204 = vadd.f32 %v118, %v120
  %v205 = vadd.f32 %v204, %v189
  %v206 = vadd.f32 %v205, %v191
  %207 = vadd.xlane.f32.xlu0 %v206
  %v208 = vpop.xlane.xlu0 %207
  %v209 = vadd.f32 %v203, %v208
  %vm210 = vcmask 7168
  %211 = vst.msk [vmem:[%s3] sm:$0xff] %vm210, %v209
  %v212 = vld [vmem:[%s3] sm:$0xff]
  %v213 = vmul.f32 %v118, %v118
  %v214 = vmul.f32 %v120, %v120
  %v215 = vmul.f32 %v189, %v189
  %v216 = vmul.f32 %v191, %v191
  %v217 = vadd.f32 %v213, %v214
  %v218 = vadd.f32 %v217, %v215
  %v219 = vadd.f32 %v218, %v216
  %220 = vadd.xlane.f32.xlu0 %v219
  %v221 = vpop.xlane.xlu0 %220
  %v222 = vadd.f32 %v212, %v221
  %vm223 = vcmask 15368
  %224 = vst.msk [vmem:[%s3] sm:$0xff] %vm223, %v222
  // Predicated region
  $region14: #{block_nd_forward.2} parent=0 // pred_check
    _
  $region15: #{block_nd_forward.2} parent=0 // pred_check_branch
    %226 = sbr.rel (0) target = $region17
  $region16: #{block_nd_forward.2} parent=0 // pred_region
    _
  $region17: #{block_nd_forward.2} parent=0 // pred_fallthru
    _
  // Predicated region
  $region18: #{block_nd_forward.2} parent=0 // pred_check
    _
  $region19: #{block_nd_forward.2} parent=0 // pred_check_branch
    %228 = sbr.rel (0) target = $region21
  $region20: #{block_nd_forward.2} parent=0 // pred_region
    _
  $region21: #{block_nd_forward.2} parent=0 // pred_fallthru
    _
  // Predicated region
  $region22: #{block_nd_forward.2} parent=0 // pred_check
    _
  $region23: #{block_nd_forward.2} parent=0 // pred_check_branch
    %230 = sbr.rel (0) target = $region25
  $region24: #{block_nd_forward.2} parent=0 // pred_region
    _
  $region25: #{block_nd_forward.2} parent=0 // pred_fallthru
    _
  // Predicated region
  $region26: #{block_nd_forward.2} parent=0 // pred_check
    _
  $region27: #{block_nd_forward.2} parent=0 // pred_check_branch
    %232 = sbr.rel (0) target = $region29
  $region28: #{block_nd_forward.2} parent=0 // pred_region
    _
  $region29: #{block_nd_forward.2} parent=0 // pred_fallthru
    _

</llo_original>
